<compile_context>
chip_gen: v7x
topology: tpu7x:2x2x1
jax: 0.10.0
libtpu: 0.0.40
codegen_flags: <defaults>
</compile_context>

<pallas_src>
import functools

import jax
import jax.numpy as jnp
import numpy as np
from jax.experimental import pallas as pl
from jax.experimental.pallas import tpu as pltpu


def _conv2d_kernel(x_ref, bcat_ref, bias_ref, o_ref, lhs_ref, *,
                   K, pad, H, WC_in, activation):
    """One full image (one batch element) per grid step.

    x_ref    : (1, H, W*Cin)      folded input image                 (VMEM)
    bcat_ref : (K*W*Cin, W*Cout)  K banded weight mats, concatenated (VMEM)
    bias_ref : (1, W*Cout)        bias tiled over W, f32             (VMEM)
    o_ref    : (1, H, W*Cout)
    lhs_ref  : (H, K*W*Cin)       VMEM scratch: im2col LHS
    """
    # ---- build the im2col LHS: lhs[h, kh*WCin + j] = x[h + kh - pad, j] ----
    # One image per step => image borders are block borders, so the H-direction
    # zero padding is handled with static slices (no pl.when, no halo refetch).
    for kh in range(K):                        # unrolled; K is static & small
        lo = kh - pad                          # row shift of this tap
        d0 = max(0, -lo)                       # first valid destination row
        d1 = H - max(0, lo)                    # one past last valid dest row
        c0, c1 = kh * WC_in, (kh + 1) * WC_in
        if d0 > 0:
            lhs_ref[0:d0, c0:c1] = jnp.zeros((d0, WC_in), lhs_ref.dtype)
        if d1 < H:
            lhs_ref[d1:H, c0:c1] = jnp.zeros((H - d1, WC_in), lhs_ref.dtype)
        lhs_ref[d0:d1, c0:c1] = x_ref[0, d0 + lo:d1 + lo, :]

    # ---- single deep matmul: (H, K*W*Cin) @ (K*W*Cin, W*Cout), f32 acc ----
    acc = jnp.dot(lhs_ref[...], bcat_ref[...],
                  preferred_element_type=jnp.float32)
    acc = acc + bias_ref[...].astype(jnp.float32)      # (H,WCo) + (1,WCo)
    if activation == "lrelu":
        # Spec module applies plain leaky_relu(0.2) with no extra gain.
        acc = jnp.where(acc >= 0, acc, 0.2 * acc)
    o_ref[0] = acc.astype(o_ref.dtype)


def conv2d_layer(x_nchw, weight_oihw, bias, *, activation="linear",
                 compute_dtype=None):
    """Pallas implementation of Conv2dLayer.forward (down=1 path).

    compute_dtype: optional MXU operand dtype (e.g. jnp.bfloat16 on v5e);
    accumulation is always f32, output keeps x's dtype.
    """
    # TODO(synk): the down>1 path (Upfirdn2d [1,3,3,1] low-pass + stride-2
    #             conv) is not implemented; only the default down=1 branch is.
    N, Cin, H, W = x_nchw.shape
    Cout, Cin_w, K, K2 = weight_oihw.shape
    assert Cin_w == Cin and K == K2 and K % 2 == 1
    assert H >= K, "image height must cover the kernel"

    pad = K // 2
    gain = 1.0 / float(np.sqrt(Cin * K * K))
    WC_in, WC_out = W * Cin, W * Cout
    KWC_in = K * WC_in
    op_dtype = jnp.dtype(x_nchw.dtype if compute_dtype is None else compute_dtype)
    out_dtype = x_nchw.dtype

    # ---- layout glue (pure JAX, once per call) ----
    # x: NCHW -> (N, H, W*Cin): fold (W, Cin) onto the lane axis.
    x_fold = jnp.transpose(x_nchw, (0, 2, 3, 1)).reshape(N, H, WC_in)
    x_fold = x_fold.astype(op_dtype)

    # Banded (Toeplitz-in-W) weight matrices: for each tap kh,
    #   B[kh, w2*Cin + c, w*Cout + co] = gain * weight[co, c, kh, w2 - w + pad]
    # (zero outside the band, which also encodes the W-direction zero padding).
    # The K taps are concatenated along the contraction dim so the kernel
    # issues ONE deep matmul per image instead of K shallow ones.
    wt = weight_oihw.astype(jnp.float32) * gain                # (Cout,Cin,K,K)
    w2 = jnp.arange(W)[:, None]
    w_ = jnp.arange(W)[None, :]
    kw_idx = w2 - w_ + pad                                     # (W, W)
    valid = (kw_idx >= 0) & (kw_idx < K)
    sel = wt[:, :, :, jnp.clip(kw_idx, 0, K - 1)]              # (Cout,Cin,K,W,W)
    sel = jnp.where(valid[None, None, None], sel, 0.0)
    b_cat = jnp.transpose(sel, (2, 3, 1, 4, 0)).reshape(KWC_in, WC_out)
    b_cat = b_cat.astype(op_dtype)
    # TODO(synk): the band is only ~K/W dense; for large W, tile the W axis
    #             (or fall back to a K*K*Cin im2col contraction), and stream
    #             b_cat from HBM once K*W^2*Cin*Cout bytes no longer fits
    #             comfortably in v7x's 64 MiB VMEM.

    bias_fold = jnp.tile(bias.astype(jnp.float32), W).reshape(1, WC_out)

    kernel = functools.partial(_conv2d_kernel, K=K, pad=pad, H=H,
                               WC_in=WC_in, activation=activation)

    in_item = op_dtype.itemsize
    out_item = jnp.dtype(out_dtype).itemsize
    cost = pl.CostEstimate(
        flops=2 * N * H * KWC_in * WC_out,
        transcendentals=0,
        bytes_accessed=(N * H * WC_in * in_item        # x (fetched once)
                        + KWC_in * WC_out * in_item    # fused banded weights
                        + WC_out * 4                   # bias (f32)
                        + N * H * WC_out * out_item),  # output
    )

    # VMEM budget: double-buffered blocks + the im2col scratch, with headroom.
    block_bytes = (H * WC_in * in_item + KWC_in * WC_out * in_item
                   + WC_out * 4 + H * WC_out * out_item)
    scratch_bytes = H * KWC_in * in_item
    vmem_limit = int(min(max(4 * (2 * block_bytes + scratch_bytes), 2 << 20),
                         64 << 20))

    # Grid: one image per step.  N >= 2 keeps >= 2 "parallel" steps so both
    # v7x TensorCores get work and DMAs pipeline against compute.
    # TODO(synk): for large N with small H, fold several images into one block
    #             (M = NB*H rows per matmul) to push MXU M-utilisation higher.
    out_fold = pl.pallas_call(
        kernel,
        out_shape=jax.ShapeDtypeStruct((N, H, WC_out), out_dtype),
        grid_spec=pltpu.PrefetchScalarGridSpec(
            num_scalar_prefetch=0,
            grid=(N,),
            in_specs=[
                pl.BlockSpec((1, H, WC_in), lambda n: (n, 0, 0)),
                pl.BlockSpec((KWC_in, WC_out), lambda n: (0, 0)),
                pl.BlockSpec((1, WC_out), lambda n: (0, 0)),
            ],
            out_specs=pl.BlockSpec((1, H, WC_out), lambda n: (n, 0, 0)),
            scratch_shapes=[pltpu.VMEM((H, KWC_in), op_dtype)],
        ),
        compiler_params=pltpu.CompilerParams(
            dimension_semantics=("parallel",),
            vmem_limit_bytes=vmem_limit,
        ),
        cost_estimate=cost,
    )(x_fold, b_cat, bias_fold)

    # (N, H, W*Cout) -> (N, H, W, Cout) -> NCHW
    return jnp.transpose(out_fold.reshape(N, H, W, Cout), (0, 3, 1, 2))


def _reference(x_nchw, weight_oihw, bias, *, activation="linear"):
    N, Cin, H, W = x_nchw.shape
    Cout, _, K, _ = weight_oihw.shape
    gain = 1.0 / float(np.sqrt(Cin * K * K))
    pad = K // 2
    y = jax.lax.conv_general_dilated(
        x_nchw, weight_oihw * gain,
        window_strides=(1, 1),
        padding=((pad, pad), (pad, pad)),
        dimension_numbers=("NCHW", "OIHW", "NCHW"),
    )
    y = y + bias[None, :, None, None]
    if activation == "lrelu":
        y = jnp.where(y >= 0, y, 0.2 * y)
    return y


if __name__ == "__main__":
    # Module config: in_features=4, out_features=8, kernel_size=3,
    # bias=True, bias_init=0.0, activation='linear'/'lrelu', down=1.
    N, Cin, H, W = 2, 4, 16, 16
    Cout, K = 8, 3

    key = jax.random.PRNGKey(0)
    kx, kw = jax.random.split(key)
    x = jax.random.normal(kx, (N, Cin, H, W), dtype=jnp.float32)
    weight = jax.random.normal(kw, (Cout, Cin, K, K), dtype=jnp.float32)  # torch.randn
    bias = jnp.zeros((Cout,), dtype=jnp.float32)                          # bias_init=0.0

    out = conv2d_layer(x, weight, bias, activation="linear")
    out = jax.block_until_ready(out)
    ref = _reference(x, weight, bias, activation="linear")
    np.testing.assert_allclose(np.asarray(out), np.asarray(ref),
                               rtol=2e-5, atol=2e-5)

    out2 = jax.block_until_ready(conv2d_layer(x, weight, bias, activation="lrelu"))
    ref2 = _reference(x, weight, bias, activation="lrelu")
    np.testing.assert_allclose(np.asarray(out2), np.asarray(ref2),
                               rtol=2e-5, atol=2e-5)

    print("KERNEL_OK")
</pallas_src>

<mosaic_0001>
module attributes {stable_mosaic.version = 11 : i64} {
  func.func @_conv2d_kernel(%arg0: i32, %arg1: memref<1x16x64xf32, #tpu.memory_space<vmem>>, %arg2: memref<192x128xf32, #tpu.memory_space<vmem>>, %arg3: memref<1x128xf32, #tpu.memory_space<vmem>>, %arg4: memref<1x16x128xf32, #tpu.memory_space<vmem>>, %arg5: memref<16x192xf32, #tpu.memory_space<vmem>>) attributes {dimension_semantics = [#tpu.dimension_semantics<parallel>], iteration_bounds = array<i64: 2>, scalar_prefetch = 0 : i64, scratch_operands = 1 : i64, tpu.core_type = #tpu.core_type<tc>, window_params = [{transform_indices = @transform_0, window_bounds = array<i64: 1, 16, 64>}, {pipeline_mode = #tpu.pipeline_mode<synchronous>, transform_indices = @transform_1, window_bounds = array<i64: 192, 128>}, {pipeline_mode = #tpu.pipeline_mode<synchronous>, transform_indices = @transform_2, window_bounds = array<i64: 1, 128>}, {transform_indices = @transform_3, window_bounds = array<i64: 1, 16, 128>}]} {
    %cst = arith.constant 0.000000e+00 : f32
    %0 = vector.broadcast %cst : f32 to vector<1x64xf32>
    %c0 = arith.constant 0 : index
    %c0_0 = arith.constant 0 : index
    %1 = vector.load %arg5[%c0, %c0_0] : memref<16x192xf32, #tpu.memory_space<vmem>>, vector<1x64xf32>
    tpu.vector_store %arg5[%c0, %c0_0], %0 {strides = array<i32>} : memref<16x192xf32, #tpu.memory_space<vmem>>, vector<1x64xf32>,
    %c0_1 = arith.constant 0 : index
    %c0_2 = arith.constant 0 : index
    %c0_3 = arith.constant 0 : index
    %2 = vector.load %arg1[%c0_1, %c0_2, %c0_3] : memref<1x16x64xf32, #tpu.memory_space<vmem>>, vector<1x15x64xf32>
    %3 = vector.shape_cast %2 : vector<1x15x64xf32> to vector<15x64xf32>
    %c1 = arith.constant 1 : index
    %c0_4 = arith.constant 0 : index
    %4 = vector.load %arg5[%c1, %c0_4] : memref<16x192xf32, #tpu.memory_space<vmem>>, vector<15x64xf32>
    tpu.vector_store %arg5[%c1, %c0_4], %3 {strides = array<i32>} : memref<16x192xf32, #tpu.memory_space<vmem>>, vector<15x64xf32>,
    %c0_5 = arith.constant 0 : index
    %c0_6 = arith.constant 0 : index
    %c0_7 = arith.constant 0 : index
    %5 = vector.load %arg1[%c0_5, %c0_6, %c0_7] : memref<1x16x64xf32, #tpu.memory_space<vmem>>, vector<1x16x64xf32>
    %6 = vector.shape_cast %5 : vector<1x16x64xf32> to vector<16x64xf32>
    %c0_8 = arith.constant 0 : index
    %c64 = arith.constant 64 : index
    %7 = vector.load %arg5[%c0_8, %c64] : memref<16x192xf32, #tpu.memory_space<vmem>>, vector<16x64xf32>
    tpu.vector_store %arg5[%c0_8, %c64], %6 {strides = array<i32>} : memref<16x192xf32, #tpu.memory_space<vmem>>, vector<16x64xf32>,
    %cst_9 = arith.constant 0.000000e+00 : f32
    %8 = vector.broadcast %cst_9 : f32 to vector<1x64xf32>
    %c15 = arith.constant 15 : index
    %c128 = arith.constant 128 : index
    %9 = vector.load %arg5[%c15, %c128] : memref<16x192xf32, #tpu.memory_space<vmem>>, vector<1x64xf32>
    tpu.vector_store %arg5[%c15, %c128], %8 {strides = array<i32>} : memref<16x192xf32, #tpu.memory_space<vmem>>, vector<1x64xf32>,
    %c0_10 = arith.constant 0 : index
    %c1_11 = arith.constant 1 : index
    %c0_12 = arith.constant 0 : index
    %10 = vector.load %arg1[%c0_10, %c1_11, %c0_12] : memref<1x16x64xf32, #tpu.memory_space<vmem>>, vector<1x15x64xf32>
    %11 = vector.shape_cast %10 : vector<1x15x64xf32> to vector<15x64xf32>
    %c0_13 = arith.constant 0 : index
    %c128_14 = arith.constant 128 : index
    %12 = vector.load %arg5[%c0_13, %c128_14] : memref<16x192xf32, #tpu.memory_space<vmem>>, vector<15x64xf32>
    tpu.vector_store %arg5[%c0_13, %c128_14], %11 {strides = array<i32>} : memref<16x192xf32, #tpu.memory_space<vmem>>, vector<15x64xf32>,
    %c0_15 = arith.constant 0 : index
    %c0_16 = arith.constant 0 : index
    %13 = vector.load %arg5[%c0_15, %c0_16] : memref<16x192xf32, #tpu.memory_space<vmem>>, vector<16x192xf32>
    %c0_17 = arith.constant 0 : index
    %c0_18 = arith.constant 0 : index
    %14 = vector.load %arg2[%c0_17, %c0_18] : memref<192x128xf32, #tpu.memory_space<vmem>>, vector<192x128xf32>
    %cst_19 = arith.constant dense<0.000000e+00> : vector<16x128xf32>
    %15 = tpu.matmul %13, %14, %cst_19 {dimension_numbers = #tpu.dot_dimension_numbers<[1], [0], [0], [1], [0, 0, 1, 1], [], []>} : vector<16x192xf32>, vector<192x128xf32>, vector<16x128xf32> -> vector<16x128xf32>
    %c0_20 = arith.constant 0 : index
    %c0_21 = arith.constant 0 : index
    %16 = vector.load %arg3[%c0_20, %c0_21] : memref<1x128xf32, #tpu.memory_space<vmem>>, vector<1x128xf32>
    %17 = vector.broadcast %16 : vector<1x128xf32> to vector<16x128xf32>
    %18 = arith.addf %15, %17 : vector<16x128xf32>
    %c0_22 = arith.constant 0 : index
    %c0_23 = arith.constant 0 : index
    %c0_24 = arith.constant 0 : index
    %19 = vector.load %arg4[%c0_22, %c0_23, %c0_24] : memref<1x16x128xf32, #tpu.memory_space<vmem>>, vector<1x16x128xf32>
    %20 = vector.shape_cast %19 : vector<1x16x128xf32> to vector<16x128xf32>
    %21 = vector.shape_cast %18 : vector<16x128xf32> to vector<1x16x128xf32>
    tpu.vector_store %arg4[%c0_22, %c0_23, %c0_24], %21 {strides = array<i32>} : memref<1x16x128xf32, #tpu.memory_space<vmem>>, vector<1x16x128xf32>,
    return
  }
  func.func @transform_0(%arg0: i32) -> (i32, i32, i32) {
    %c0_i32 = arith.constant 0 : i32
    %c0_i32_0 = arith.constant 0 : i32
    %c0_i32_1 = arith.constant 0 : i32
    return %arg0, %c0_i32, %c0_i32_0 : i32, i32, i32
  }
  func.func @transform_1(%arg0: i32) -> (i32, i32) {
    %c0_i32 = arith.constant 0 : i32
    %c0_i32_0 = arith.constant 0 : i32
    %c0_i32_1 = arith.constant 0 : i32
    return %c0_i32, %c0_i32_0 : i32, i32
  }
  func.func @transform_2(%arg0: i32) -> (i32, i32) {
    %c0_i32 = arith.constant 0 : i32
    %c0_i32_0 = arith.constant 0 : i32
    %c0_i32_1 = arith.constant 0 : i32
    return %c0_i32, %c0_i32_0 : i32, i32
  }
  func.func @transform_3(%arg0: i32) -> (i32, i32, i32) {
    %c0_i32 = arith.constant 0 : i32
    %c0_i32_0 = arith.constant 0 : i32
    %c0_i32_1 = arith.constant 0 : i32
    return %arg0, %c0_i32, %c0_i32_0 : i32, i32, i32
  }
}

</mosaic_0001>

<llo_original>
// kernel: tpu_custom_call.1
$region0: #{tpu_custom_call.1}
  #allocation0 [shape = 'u32[]', space=smem, size = 0x4, offset = 0x4, fixed_abs, tag = 'smem constant byte address 0x4 - core index']
  #allocation1 [shape = 'u32[144,128]{1,0:T(1,128)}', space=vmem, size = 0x12000, scoped, tag = 'internal scratch']
  #allocation2 [shape = 'f32[16,192]{1,0:T(8,128)}', space=vmem, size = 0x4000, scoped, tag = 'scratch operand']
  %s0 = inlined_call_operand.hbm [shape: f32[2,16,64], index: 0, kind: input, shape index: {}]
  %s1 = inlined_call_operand.hbm [shape: f32[192,128], index: 1, kind: input, shape index: {}]
  %s2 = inlined_call_operand.vmem [shape: f32[1,128], index: 2, kind: input, shape index: {}]
  %s3 = inlined_call_operand.hbm [shape: f32[2,16,128], index: 3, kind: output, shape index: {}]
  %s4 = sld [smem:[#allocation0]]
  $region53: #{tpu_custom_call.1} parent=0
    _
  %s6 = ssub.s32 1, %s4
  %s7 = scalar_select 0, %s6, %s4
  $region1: #{tpu_custom_call.1} parent=0
    #allocation3 [shape = 'u8[16384]{0}', space=vmem, size = 0x4000, scoped, tag = 'input window, operand 0']
    #allocation4 [shape = 's32[2]{0}', space=sflag, size = 0x8, scoped, tag = 'scoped memory for tpu_custom_call.1']
    #allocation5 [shape = 's32[2]{0}', space=sflag, size = 0x8, scoped, tag = 'scoped memory for tpu_custom_call.1']
    #allocation6 [shape = 'u8[98304]{0}', space=vmem, size = 0x18000, scoped, tag = 'input window, operand 1, single buffered']
    #allocation7 [shape = 's32[1]{0}', space=sflag, size = 0x4, scoped, tag = 'scoped memory for tpu_custom_call.1']
    #allocation8 [shape = 'u8[16384]{0}', space=vmem, size = 0x4000, scoped, tag = 'output window, operand 0']
    %8 = vsyncpa [#allocation4], 0
    %s9 = scalar_lea.sflag [#allocation4], 1
    %10 = vsyncpa %s9, 0
    %11 = vsyncpa [#allocation7], 0
    %12 = vsyncpa [#allocation5], 0
    %s13 = scalar_lea.sflag [#allocation5], 1
    %14 = vsyncpa %s13, 0
    loop: start=0, step=1, limit=4
    $region2: #{tpu_custom_call.1} parent=1 // loop_pre_header
      _
    $region3: #{tpu_custom_call.1} parent=1 // loop_header
      %s16 = sphi 0, %s20
      %p17 = scmp.ge.s32.totalorder %s16, 4
      %s26 = sphi 0, %s28
      %s29 = sphi 0, %s26
      %s30 = sphi 0, %s29
      %s46 = sphi 0, %s30
      %s50 = sphi 0, %s50
      %s52 = sphi 0, %s50
      %s53 = sphi 0, %s52
      %s67 = sphi 0, %s53
      %s71 = sphi 0, %s71
      %s73 = sphi 0, %s71
      %s74 = sphi 0, %s73
      %s88 = sphi 0, %s74
      %s94 = sphi 0, %s96
      %s97 = sphi 0, %s94
      %s98 = sphi 0, %s97
      %s114 = sphi 0, %s98
    $region4: #{tpu_custom_call.1} parent=1 // loop_header_branch
      %19 = sbr.rel (%p17) target = $region8
    $region5: #{tpu_custom_call.1} parent=1 // loop_body
      %s21 = ssub.s32 %s16, 1
      %s22 = ssub.s32 %s16, 2
      %s23 = sadd.s32 %s16, 1
      %s24 = ssub.s32 %s16, %s23
      %p25 = scmp.eq.s32.totalorder %s24, 0
      %s27 = sadd.s32 %s26, 1
      %s28 = scalar_select %p25, %s26, %s27
      %p31 = pneg %p25
      %p32 = scmp.eq.s32.totalorder %s16, 1
      %p33 = por %p31, %p32
      %p34 = scmp.ne.s32.totalorder %s26, %s29
      %p35 = scmp.eq.s32.totalorder %s16, 0
      %p36 = por %p34, %p35
      %p37 = scmp.ne.s32.totalorder %s26, %s29
      %p38 = scmp.eq.s32.totalorder %s21, 1
      %p39 = por %p37, %p38
      %p40 = scmp.ne.s32.totalorder %s29, %s30
      %p41 = scmp.eq.s32.totalorder %s21, 0
      %p42 = por %p40, %p41
      %p43 = scmp.ne.s32.totalorder %s29, %s30
      %p44 = scmp.eq.s32.totalorder %s22, 1
      %p45 = por %p43, %p44
      %p47 = scmp.ne.s32.totalorder %s30, %s46
      %p48 = scmp.eq.s32.totalorder %s22, 0
      %p49 = por %p47, %p48
      %s51 = sadd.s32 %s50, 1
      %p54 = scmp.eq.s32.totalorder %s16, 1
      %p55 = scmp.ne.s32.totalorder %s50, %s52
      %p56 = scmp.eq.s32.totalorder %s16, 0
      %p57 = por %p55, %p56
      %p58 = scmp.ne.s32.totalorder %s50, %s52
      %p59 = scmp.eq.s32.totalorder %s21, 1
      %p60 = por %p58, %p59
      %p61 = scmp.ne.s32.totalorder %s52, %s53
      %p62 = scmp.eq.s32.totalorder %s21, 0
      %p63 = por %p61, %p62
      %p64 = scmp.ne.s32.totalorder %s52, %s53
      %p65 = scmp.eq.s32.totalorder %s22, 1
      %p66 = por %p64, %p65
      %p68 = scmp.ne.s32.totalorder %s53, %s67
      %p69 = scmp.eq.s32.totalorder %s22, 0
      %p70 = por %p68, %p69
      %s72 = sadd.s32 %s71, 1
      %p75 = scmp.eq.s32.totalorder %s16, 1
      %p76 = scmp.ne.s32.totalorder %s71, %s73
      %p77 = scmp.eq.s32.totalorder %s16, 0
      %p78 = por %p76, %p77
      %p79 = scmp.ne.s32.totalorder %s71, %s73
      %p80 = scmp.eq.s32.totalorder %s21, 1
      %p81 = por %p79, %p80
      %p82 = scmp.ne.s32.totalorder %s73, %s74
      %p83 = scmp.eq.s32.totalorder %s21, 0
      %p84 = por %p82, %p83
      %p85 = scmp.ne.s32.totalorder %s73, %s74
      %p86 = scmp.eq.s32.totalorder %s22, 1
      %p87 = por %p85, %p86
      %p89 = scmp.ne.s32.totalorder %s74, %s88
      %p90 = scmp.eq.s32.totalorder %s22, 0
      %p91 = por %p89, %p90
      %s92 = ssub.s32 %s16, %s23
      %p93 = scmp.eq.s32.totalorder %s92, 0
      %s95 = sadd.s32 %s94, 1
      %s96 = scalar_select %p93, %s94, %s95
      %p99 = pneg %p93
      %p100 = scmp.eq.s32.totalorder %s16, 1
      %p101 = por %p99, %p100
      %p102 = scmp.ne.s32.totalorder %s94, %s97
      %p103 = scmp.eq.s32.totalorder %s16, 0
      %p104 = por %p102, %p103
      %p105 = scmp.ne.s32.totalorder %s94, %s97
      %p106 = scmp.eq.s32.totalorder %s21, 1
      %p107 = por %p105, %p106
      %p108 = scmp.ne.s32.totalorder %s97, %s98
      %p109 = scmp.eq.s32.totalorder %s21, 0
      %p110 = por %p108, %p109
      %p111 = scmp.ne.s32.totalorder %s97, %s98
      %p112 = scmp.eq.s32.totalorder %s22, 1
      %p113 = por %p111, %p112
      %p115 = scmp.ne.s32.totalorder %s98, %s114
      %p116 = scmp.eq.s32.totalorder %s22, 0
      %p117 = por %p115, %p116
      %p118 = scmp.le.s32.totalorder 1, %s16
      %p119 = scmp.lt.s32.totalorder %s16, 3
      %p120 = pnand %p118, %p119
      %p121 = pneg %p120
      // Predicated region
      $region9: #{tpu_custom_call.1} parent=5 // pred_check
        _
      $region10: #{tpu_custom_call.1} parent=5 // pred_check_branch
        %123 = sbr.rel (%p120) target = $region12
      $region11: #{tpu_custom_call.1} parent=5 // pred_region
        %s124 = ssub.s32 %s16, 1
        // Predicated region
        $region13: #{tpu_custom_call.1} parent=11 // pred_check
          %p125 = pneg %p63
        $region14: #{tpu_custom_call.1} parent=11 // pred_check_branch
          %127 = sbr.rel (%p125) target = $region16
        $region15: #{tpu_custom_call.1} parent=11 // pred_region
          %s129 = ssub.s32 3072, 3072
          %130 = vsyncadd [#allocation7], %s129
          %s131 = sshll.u32 [#allocation6], 4
          %s132 = int_to_ptr.vmem [resolvable:$true] %s131
          %137 = dma.hbm_to_vmem [thread:$0]  %s1, 3072, %s132, [#allocation7], 128, 128, 8
        $region16: #{tpu_custom_call.1} parent=11 // pred_fallthru
          _
        // Predicated region
        $region17: #{tpu_custom_call.1} parent=11 // pred_check
          %p138 = pneg %p84
        $region18: #{tpu_custom_call.1} parent=11 // pred_check_branch
          %140 = sbr.rel (%p138) target = $region20
        $region19: #{tpu_custom_call.1} parent=11 // pred_region
          _
        $region20: #{tpu_custom_call.1} parent=11 // pred_fallthru
          _
      $region12: #{tpu_custom_call.1} parent=5 // pred_fallthru
        _
      %p141 = scmp.lt.s32.totalorder %s16, 2
      // Predicated region
      $region21: #{tpu_custom_call.1} parent=5 // pred_check
        %p142 = pneg %p141
      $region22: #{tpu_custom_call.1} parent=5 // pred_check_branch
        %144 = sbr.rel (%p142) target = $region24
      $region23: #{tpu_custom_call.1} parent=5 // pred_region
        // Predicated region
        $region25: #{tpu_custom_call.1} parent=23 // pred_check
          %p145 = pneg %p36
        $region26: #{tpu_custom_call.1} parent=23 // pred_check_branch
          %147 = sbr.rel (%p145) target = $region28
        $region27: #{tpu_custom_call.1} parent=23 // pred_region
          %s148 = sand.u32 %s26, 1
          %s149 = scalar_lea.sflag [#allocation4], %s148
          %s150 = sand.u32 %s26, 1
          %s151 = smul.addr %s150, 16
          %s152 = scalar_lea.vmem [#allocation3], %s151
          %s154 = ssub.s32 256, 256
          %155 = vsyncadd %s149, %s154
          %s156 = smul.addr %s16, 2
          %s157 = smul.addr %s156, 128
          %s158 = scalar_lea.hbm %s0, %s157
          %s159 = sshll.u32 %s152, 4
          %s160 = int_to_ptr.vmem [resolvable:$true] %s159
          %165 = dma.hbm_to_vmem [thread:$0]  %s158, 256, %s160, %s149, 128, 128, 8
        $region28: #{tpu_custom_call.1} parent=23 // pred_fallthru
          _
      $region24: #{tpu_custom_call.1} parent=5 // pred_fallthru
        _
      %p166 = scmp.le.s32.totalorder 1, %s16
      %p167 = scmp.lt.s32.totalorder %s16, 3
      %p168 = pnand %p166, %p167
      %p169 = pneg %p168
      // Predicated region
      $region29: #{tpu_custom_call.1} parent=5 // pred_check
        _
      $region30: #{tpu_custom_call.1} parent=5 // pred_check_branch
        %171 = sbr.rel (%p168) target = $region32
      $region31: #{tpu_custom_call.1} parent=5 // pred_region
        %s172 = ssub.s32 %s16, 1
        %s173 = sand.u32 %s29, 1
        %s174 = scalar_lea.sflag [#allocation4], %s173
        %s175 = sand.u32 %s29, 1
        %s176 = smul.addr %s175, 16
        %s177 = scalar_lea.vmem [#allocation3], %s176
        // Predicated region
        $region33: #{tpu_custom_call.1} parent=31 // pred_check
          %p178 = pneg %p42
        $region34: #{tpu_custom_call.1} parent=31 // pred_check_branch
          %180 = sbr.rel (%p178) target = $region36
        $region35: #{tpu_custom_call.1} parent=31 // pred_region
          %181 = dma.done %s174, 256
        $region36: #{tpu_custom_call.1} parent=31 // pred_fallthru
          _
        // Predicated region
        $region37: #{tpu_custom_call.1} parent=31 // pred_check
          %p182 = pneg %p63
        $region38: #{tpu_custom_call.1} parent=31 // pred_check_branch
          %184 = sbr.rel (%p182) target = $region40
        $region39: #{tpu_custom_call.1} parent=31 // pred_region
          %185 = dma.done [#allocation7], 3072
        $region40: #{tpu_custom_call.1} parent=31 // pred_fallthru
          _
        %s186 = sand.u32 %s29, 1
        %s187 = scalar_lea.sflag [#allocation4], %s186
        %s188 = sand.u32 %s29, 1
        %s189 = smul.addr %s188, 16
        %s190 = scalar_lea.vmem [#allocation3], %s189
        %p191 = pneg %p42
        %p192 = pneg %p39
        %p193 = pneg %p63
        %p194 = pneg %p60
        %p195 = pneg %p84
        %p196 = pneg %p81
        %p197 = pneg %p110
        %p198 = pneg %p107
        %s199 = sand.u32 %s97, 1
        %s200 = scalar_lea.sflag [#allocation5], %s199
        %s201 = sand.u32 %s97, 1
        %s202 = smul.addr %s201, 16
        %s203 = scalar_lea.vmem [#allocation8], %s202
        %vm204 = vcmask 516096
        %205 = vst.msk [vmem:[#allocation2] sm:$0x1] %vm204, 0.0
        %v206 = vld [vmem:[%s177] sm:$0xff]
        %v207 = vld [vmem:[%s177 + $0x8] sm:$0x7f]
        %vm210 = vcmask 1040384
        %v211 = vrot.slane %v206, 7
        %v212 = vrot.slane %v207, 7
        %v213 = vsel %vm210, %v211, %v212
        %vm216 = vcmask 523265
        %217 = vst.msk [vmem:[#allocation2] sm:$0xfe] %vm216, %v211
        %vm218 = vcmask 523264
        %219 = vst.msk [vmem:[#allocation2 + $0x10] sm:$0xff] %vm218, %v213
        %v220 = vld [vmem:[%s177] sm:$0xff]
        %v221 = vld [vmem:[%s177 + $0x8] sm:$0xff]
        %224 = vrot.lane.b32.xlu0 %v220, 64
        %v225 = vpop.permute.xlu0 %224
        %226 = vrot.lane.b32.xlu0 %v221, 64
        %v227 = vpop.permute.xlu0 %226
        %vm230 = vcmask 1048064
        %231 = vst.msk [vmem:[#allocation2] sm:$0xff] %vm230, %v225
        %232 = vst.msk [vmem:[#allocation2 + $0x10] sm:$0xff] %vm230, %v227
        %233 = vst.msk [vmem:[#allocation2 + $0x1f] sm:$0x1] %vm204, 0.0
        %v234 = vld [vmem:[%s177 + $0x1] sm:$0xff]
        %v235 = vld [vmem:[%s177 + $0x9] sm:$0x7f]
        %236 = vst.msk [vmem:[#allocation2 + $0x8] sm:$0xff] %vm218, %v234
        %vm237 = vcmask 522240
        %238 = vst.msk [vmem:[#allocation2 + $0x18] sm:$0x7f] %vm237, %v235
        %v239 = vld [vmem:[#allocation2] sm:$0xff]
        %v240 = vld [vmem:[#allocation2 + $0x8] sm:$0xff]
        %v241 = vld [vmem:[#allocation2 + $0x10] sm:$0xff]
        %v242 = vld [vmem:[#allocation2 + $0x18] sm:$0xff]
        %v243 = vld [vmem:[#allocation6] sm:$0xff]
        %v244 = vld [vmem:[#allocation6 + $0x8] sm:$0xff]
        %v245 = vld [vmem:[#allocation6 + $0x10] sm:$0xff]
        %v246 = vld [vmem:[#allocation6 + $0x18] sm:$0xff]
        %v247 = vld [vmem:[#allocation6 + $0x20] sm:$0xff]
        %v248 = vld [vmem:[#allocation6 + $0x28] sm:$0xff]
        %v249 = vld [vmem:[#allocation6 + $0x30] sm:$0xff]
        %v250 = vld [vmem:[#allocation6 + $0x38] sm:$0xff]
        %v251 = vld [vmem:[#allocation6 + $0x40] sm:$0xff]
        %v252 = vld [vmem:[#allocation6 + $0x48] sm:$0xff]
        %v253 = vld [vmem:[#allocation6 + $0x50] sm:$0xff]
        %v254 = vld [vmem:[#allocation6 + $0x58] sm:$0xff]
        %v255 = vld [vmem:[#allocation6 + $0x60] sm:$0xff]
        %v256 = vld [vmem:[#allocation6 + $0x68] sm:$0xff]
        %v257 = vld [vmem:[#allocation6 + $0x70] sm:$0xff]
        %v258 = vld [vmem:[#allocation6 + $0x78] sm:$0xff]
        %v259 = vld [vmem:[#allocation6 + $0x80] sm:$0xff]
        %v260 = vld [vmem:[#allocation6 + $0x88] sm:$0xff]
        %v261 = vld [vmem:[#allocation6 + $0x90] sm:$0xff]
        %v262 = vld [vmem:[#allocation6 + $0x98] sm:$0xff]
        %v263 = vld [vmem:[#allocation6 + $0xa0] sm:$0xff]
        %v264 = vld [vmem:[#allocation6 + $0xa8] sm:$0xff]
        %v265 = vld [vmem:[#allocation6 + $0xb0] sm:$0xff]
        %v266 = vld [vmem:[#allocation6 + $0xb8] sm:$0xff]
        %v267 = vld [vmem:[%s2] sm:$0x1]
        %v269 = vlaneseq
        %v270 = vshrl.u32 %v269, 7
        %v271 = vsub.s32 0, %v270
        %v272 = vrot.slane %v267, %v271
        %v275 = vsel %vm218, %v240, 0
        %v278 = vsel %vm218, %v242, 0
        %280 = vmatprep.subr.mxu0 0.0
        %281 = vmatpush1.msra.mxu0 %v243
        %282 = vmatprep.subr.mxu0 0.0
        %283 = vmatpush1.msra.mxu0 %v244
        %284 = vmatprep.subr.mxu0 0.0
        %285 = vmatpush1.msra.mxu0 %v245
        %286 = vmatprep.subr.mxu0 0.0
        %287 = vmatpush1.msra.mxu0 %v246
        %288 = vmatprep.subr.mxu0 0.0
        %289 = vmatpush1.msra.mxu0 %v247
        %290 = vmatprep.subr.mxu0 0.0
        %291 = vmatpush1.msra.mxu0 %v248
        %292 = vmatprep.subr.mxu0 0.0
        %293 = vmatpush1.msra.mxu0 %v249
        %294 = vmatprep.subr.mxu0 0.0
        %295 = vmatpush1.msra.mxu0 %v250
        %296 = vmatprep.subr.mxu0 0.0
        %297 = vmatpush1.msra.mxu0 %v251
        %298 = vmatprep.subr.mxu0 0.0
        %299 = vmatpush1.msra.mxu0 %v252
        %300 = vmatprep.subr.mxu0 0.0
        %301 = vmatpush1.msra.mxu0 %v253
        %302 = vmatprep.subr.mxu0 0.0
        %303 = vmatpush1.msra.mxu0 %v254
        %304 = vmatprep.subr.mxu0 0.0
        %305 = vmatpush1.msra.mxu0 %v255
        %306 = vmatprep.subr.mxu0 0.0
        %307 = vmatpush1.msra.mxu0 %v256
        %308 = vmatprep.subr.mxu0 0.0
        %309 = vmatpush1.msra.mxu0 %v257
        %310 = vmatprep.subr.mxu0 0.0
        %311 = vmatpush1.msra.mxu0 %v258
        %312 = vmatprep.subr.mxu0 0.0
        %313 = vmatpush1.msra.mxu0 %v259
        %314 = vmatprep.subr.mxu0 0.0
        %315 = vmatpush1.msra.mxu0 %v260
        %316 = vmatprep.subr.mxu0 0.0
        %317 = vmatpush1.msra.mxu0 %v261
        %318 = vmatprep.subr.mxu0 0.0
        %319 = vmatpush1.msra.mxu0 %v262
        %320 = vmatprep.subr.mxu0 0.0
        %321 = vmatpush1.msra.mxu0 %v263
        %322 = vmatprep.subr.mxu0 0.0
        %323 = vmatpush1.msra.mxu0 %v264
        %324 = vmatprep.subr.mxu0 0.0
        %325 = vmatpush1.msra.mxu0 %v265
        %326 = vmatprep.subr.mxu0 0.0
        %327 = vmatpush1.msra.mxu0 %v266
        %328 = vmatprep.subr.mxu0 0.0
        %329 = vmatpush1.msra.mxu0 0.0
        %330 = vmatprep.subr.mxu0 0.0
        %331 = vmatpush1.msra.mxu0 0.0
        %332 = vmatprep.subr.mxu0 0.0
        %333 = vmatpush1.msra.mxu0 0.0
        %334 = vmatprep.subr.mxu0 0.0
        %335 = vmatpush1.msra.mxu0 0.0
        %336 = vmatprep.subr.mxu0 0.0
        %337 = vmatpush1.msra.mxu0 0.0
        %338 = vmatprep.subr.mxu0 0.0
        %339 = vmatpush1.msra.mxu0 0.0
        %340 = vmatprep.subr.mxu0 0.0
        %341 = vmatpush1.msra.mxu0 0.0
        %342 = vmatprep.subr.mxu0 0.0
        %343 = vmatpush1.msra.mxu0 0.0
        %344 = vmatprep.mubr.f32.mxu0 %v275
        %345 = vmatmul.mubr.f32.gmra.mrb[0].mxu0 %v239
        %v346 = vpop.f32.mrb[0].mxu0
        %v347 = vadd.f32 %v272, %v346
        %v348 = vpop.f32.mrb[0].mxu0
        %349 = vmatprep.mubr.f32.mxu0 %v278
        %350 = vmatmul.mubr.f32.gmra.mrb[0].mxu0 %v241
        %v351 = vpop.f32.mrb[0].mxu0
        %v352 = vadd.f32 %v272, %v351
        %v353 = vpop.f32.mrb[0].mxu0
        %354 = vdwg.mxu0
        %355 = vst [vmem:[%s203] sm:$0xff] %v347
        %356 = vst [vmem:[%s203 + $0x8] sm:$0xff] %v352
        %s357 = sand.u32 %s97, 1
        %s358 = scalar_lea.sflag [#allocation5], %s357
        %s359 = sand.u32 %s97, 1
        %s360 = smul.addr %s359, 16
        %s361 = scalar_lea.vmem [#allocation8], %s360
        // Predicated region
        $region41: #{tpu_custom_call.1} parent=31 // pred_check
          %p362 = pneg %p107
        $region42: #{tpu_custom_call.1} parent=31 // pred_check_branch
          %364 = sbr.rel (%p362) target = $region44
        $region43: #{tpu_custom_call.1} parent=31 // pred_region
          %s366 = ssub.s32 256, 256
          %367 = vsyncadd %s358, %s366
          %s368 = smul.addr %s21, 2
          %s369 = smul.addr %s368, 128
          %s370 = scalar_lea.hbm %s3, %s369
          %s371 = sshll.u32 %s361, 4
          %s372 = int_to_ptr.vmem [resolvable:$true] %s371
          %377 = dma.vmem_to_hbm [thread:$0]  %s372, 256, %s370, %s358, 128, 128, 8
        $region44: #{tpu_custom_call.1} parent=31 // pred_fallthru
          _
      $region32: #{tpu_custom_call.1} parent=5 // pred_fallthru
        _
      %p378 = scmp.le.s32.totalorder 2, %s16
      // Predicated region
      $region45: #{tpu_custom_call.1} parent=5 // pred_check
        %p379 = pneg %p378
      $region46: #{tpu_custom_call.1} parent=5 // pred_check_branch
        %381 = sbr.rel (%p379) target = $region48
      $region47: #{tpu_custom_call.1} parent=5 // pred_region
        %s382 = ssub.s32 %s16, 2
        // Predicated region
        $region49: #{tpu_custom_call.1} parent=47 // pred_check
          %p383 = pneg %p113
        $region50: #{tpu_custom_call.1} parent=47 // pred_check_branch
          %385 = sbr.rel (%p383) target = $region52
        $region51: #{tpu_custom_call.1} parent=47 // pred_region
          %s386 = sand.u32 %s98, 1
          %s387 = scalar_lea.sflag [#allocation5], %s386
          %s388 = sand.u32 %s98, 1
          %s389 = smul.addr %s388, 16
          %s390 = scalar_lea.vmem [#allocation8], %s389
          %391 = dma.done %s387, 256
        $region52: #{tpu_custom_call.1} parent=47 // pred_fallthru
          _
      $region48: #{tpu_custom_call.1} parent=5 // pred_fallthru
        _
    $region6: #{tpu_custom_call.1} parent=1 // loop_footer
      %s20 = sadd.s32 1, %s16
    $region7: #{tpu_custom_call.1} parent=1 // loop_footer_branch
      %15 = sbr.rel target = $region3
    $region8: #{tpu_custom_call.1} parent=1 // loop_exit
      _
    %392 = vsyncpa [#allocation4], 1
    %s393 = scalar_lea.sflag [#allocation4], 1
    %394 = vsyncpa %s393, 1
    %395 = vsyncpa [#allocation7], 1
    %396 = vsyncpa [#allocation5], 1
    %s397 = scalar_lea.sflag [#allocation5], 1
    %398 = vsyncpa %s397, 1

</llo_original>
